<compile_context>
chip_gen: v5e
topology: v5e:2x2
jax: 0.10.0
libtpu: 0.0.40
codegen_flags: <defaults>
</compile_context>

<pallas_src>
import functools

import jax
import jax.numpy as jnp
from jax import lax
from jax.experimental import pallas as pl
from jax.experimental.pallas import tpu as pltpu


def _attention_kernel(x_ref, xcat_ref, pen_ref, wqkv_ref, wo_ref,
                      w1_ref, b1_ref, w2_ref, b2_ref, out_ref):
    """Fused attention for a slab of br stacked rows (M = br*T).

    x_ref    : (M, C)  f32   original rows (residual / FFN base)
    xcat_ref : (M, ks*C) bf16 im2col of the ks causal-conv windows
    pen_ref  : (M, M)  f32   block-diagonal + causal penalty mask
    wqkv_ref : (ks*C, 3H) bf16 fused q/k/v weights (V on the last tap)
    wo_ref   : (H, C) bf16   w1/w2 : (C, C) bf16   b1/b2 : (1, C) f32
    out_ref  : (M, C)
    """
    h = wqkv_ref.shape[1] // 3

    x = x_ref[...].astype(jnp.float32)                              # (M, C)

    # Causal conv Q, K and 1x1 conv V in ONE MXU matmul (K = ks*C).
    qkv = jnp.dot(xcat_ref[...], wqkv_ref[...],
                  preferred_element_type=jnp.float32)               # (M, 3H) f32
    q = qkv[:, :h]
    k = qkv[:, h:2 * h]
    v = qkv[:, 2 * h:]

    # Block-diagonal causal attention over the whole M = br*T slab.
    # q/k stay f32: the logits feed exp and the contraction is only K=H wide.
    scores = lax.dot_general(q, k, (((1,), (1,)), ((), ())),
                             preferred_element_type=jnp.float32)    # (M, M)
    scores = scores - pen_ref[...]
    scores = scores - jnp.max(scores, axis=-1, keepdims=True)
    p = jnp.exp(scores)
    attn = p * pl.reciprocal(jnp.sum(p, axis=-1, keepdims=True), approx=True)

    attn_out = jnp.dot(attn.astype(jnp.bfloat16), v.astype(jnp.bfloat16),
                       preferred_element_type=jnp.float32)          # (M, H)
    out_f = x + jnp.dot(attn_out.astype(jnp.bfloat16), wo_ref[...],
                        preferred_element_type=jnp.float32)         # (M, C)

    # FFN: 1x1 conv -> ReLU -> 1x1 conv, plus residual (biases stay f32).
    b1 = b1_ref[...].astype(jnp.float32)
    b2 = b2_ref[...].astype(jnp.float32)
    h1 = jnp.maximum(
        jnp.dot(out_f.astype(jnp.bfloat16), w1_ref[...],
                preferred_element_type=jnp.float32) + b1, 0.0)
    h2 = jnp.dot(h1.astype(jnp.bfloat16), w2_ref[...],
                 preferred_element_type=jnp.float32) + b2

    out_ref[...] = (out_f + h2).astype(out_ref.dtype)


def _pick_rows_per_block(bn, t):
    """Rows per grid step: sublane-aligned M=br*T in ~[8,512], grid>=2 if possible."""
    valid = [c for c in range(1, bn + 1)
             if bn % c == 0 and ((c * t) % 8 == 0 or c == bn)]
    if not valid:
        return bn
    multi_step = [c for c in valid if bn // c >= 2] or valid   # keep v7x's 2 TCs busy
    fits = [c for c in multi_step if c * t <= 512]
    if fits:
        return max(fits, key=lambda c: c * t)
    return min(multi_step, key=lambda c: c * t)


@functools.partial(jax.jit, static_argnames=("key_kernel_size",))
def attention_forward(x, params, key_kernel_size):
    """Pallas Attention.forward for input (b, c, n, t); returns (b, c, n, t)."""
    b, c, n, t = x.shape
    ks = key_kernel_size
    pad = ks - 1
    h = c // 2
    bn = b * n

    # (b, c, n, t) -> (b*n, t, c); rows laid out time-major so contractions are
    # plain MXU matmuls with channels on the lanes.
    x_f = jnp.transpose(x, (0, 2, 3, 1)).reshape(bn, t, c)
    x2 = x_f.reshape(bn * t, c)                                      # residual base (f32)

    # im2col for the causal conv: window j multiplies x[t + j - (ks-1)]
    # (zero for negative time == chomped causal padding).  Built once here so
    # the kernel needs no sublane shifts at all; cast to bf16 for the MXU.
    x_pad = jnp.pad(x_f, ((0, 0), (pad, 0), (0, 0)))
    windows = [lax.slice_in_dim(x_pad, j, j + t, axis=1) for j in range(ks)]
    xcat = (jnp.concatenate(windows, axis=-1)
            .reshape(bn * t, ks * c).astype(jnp.bfloat16))           # (bn*T, ks*C)

    # Fused q/k/v weight: rows [j*C:(j+1)*C] are tap j; columns [q | k | v],
    # with V (a 1x1 conv of x) attached only to the last (unshifted) tap.
    wq_t = jnp.transpose(params["wq"], (2, 1, 0))                    # (ks, C, H)
    wk_t = jnp.transpose(params["wk"], (2, 1, 0))                    # (ks, C, H)
    wv_taps = jnp.zeros((ks, c, h), jnp.float32).at[ks - 1].set(params["wv"].T)
    wqkv = (jnp.concatenate([wq_t, wk_t, wv_taps], axis=-1)
            .reshape(ks * c, 3 * h).astype(jnp.bfloat16))            # (ks*C, 3H)

    wo_t = params["wo"].T.astype(jnp.bfloat16)                       # (H, C)
    w1_t = params["w1"].T.astype(jnp.bfloat16)                       # (C, C)
    w2_t = params["w2"].T.astype(jnp.bfloat16)                       # (C, C)
    b1_r = params["b1"].reshape(1, c).astype(jnp.float32)
    b2_r = params["b2"].reshape(1, c).astype(jnp.float32)

    br = _pick_rows_per_block(bn, t)
    m_blk = br * t

    # Block-diagonal + causal penalty for a slab of br rows of length t each:
    #   same row & key>query -> 1000 (matches the PyTorch mask exactly),
    #   different rows       -> 1e9  (exp underflows to exactly 0).
    ri = jnp.arange(m_blk)[:, None]
    cj = jnp.arange(m_blk)[None, :]
    same = (ri // t) == (cj // t)
    penalty = jnp.where(same, jnp.where(cj > ri, 1000.0, 0.0), 1e9).astype(jnp.float32)

    out2 = pl.pallas_call(
        _attention_kernel,
        out_shape=jax.ShapeDtypeStruct((bn * t, c), x.dtype),
        grid=(bn // br,),
        in_specs=[
            pl.BlockSpec((m_blk, c), lambda i: (i, 0)),              # x rows
            pl.BlockSpec((m_blk, ks * c), lambda i: (i, 0)),         # im2col rows
            pl.BlockSpec((m_blk, m_blk), lambda i: (0, 0)),          # mask (constant)
            pl.BlockSpec((ks * c, 3 * h), lambda i: (0, 0)),         # fused qkv weight
            pl.BlockSpec((h, c), lambda i: (0, 0)),
            pl.BlockSpec((c, c), lambda i: (0, 0)),
            pl.BlockSpec((1, c), lambda i: (0, 0)),
            pl.BlockSpec((c, c), lambda i: (0, 0)),
            pl.BlockSpec((1, c), lambda i: (0, 0)),
        ],
        out_specs=pl.BlockSpec((m_blk, c), lambda i: (i, 0)),
        compiler_params=pltpu.CompilerParams(
            dimension_semantics=("parallel",),
        ),
    )(x2, xcat, penalty, wqkv, wo_t, w1_t, b1_r, w2_t, b2_r)

    # (b*n*t, c) -> (b, n, t, c) -> (b, c, n, t)
    return out2.reshape(b, n, t, c).transpose(0, 3, 1, 2)


def init_params(key, in_channels, key_kernel_size):
    h = in_channels // 2
    ks = key_kernel_size
    keys = jax.random.split(key, 8)
    s = 0.1
    return {
        "wq": s * jax.random.normal(keys[0], (h, in_channels, ks), jnp.float32),
        "wk": s * jax.random.normal(keys[1], (h, in_channels, ks), jnp.float32),
        "wv": s * jax.random.normal(keys[2], (h, in_channels), jnp.float32),
        "wo": s * jax.random.normal(keys[3], (in_channels, h), jnp.float32),
        "w1": s * jax.random.normal(keys[4], (in_channels, in_channels), jnp.float32),
        "b1": s * jax.random.normal(keys[5], (in_channels,), jnp.float32),
        "w2": s * jax.random.normal(keys[6], (in_channels, in_channels), jnp.float32),
        "b2": s * jax.random.normal(keys[7], (in_channels,), jnp.float32),
    }


def reference_forward(x, params, key_kernel_size):
    """Plain-JAX/XLA reference mirroring the PyTorch forward exactly."""
    b, c, n, t = x.shape
    ks = key_kernel_size
    pad = ks - 1
    bn = b * n
    hp = lax.Precision.HIGHEST
    x_f = jnp.transpose(x, (0, 2, 1, 3)).reshape(bn, c, t)

    def causal_conv(inp, w):
        full = lax.conv_general_dilated(
            inp, w, window_strides=(1,), padding=[(pad, pad)],
            dimension_numbers=("NCH", "OIH", "NCH"), precision=hp)
        return full[:, :, :t]                        # chomp(ks - 1)

    q = causal_conv(x_f, params["wq"])
    k = causal_conv(x_f, params["wk"])
    v = jnp.einsum("hc,bct->bht", params["wv"], x_f, precision=hp)

    attn = jnp.einsum("bhi,bhj->bij", q, k, precision=hp)
    mask = jnp.triu(jnp.ones((t, t), jnp.float32), k=1)
    attn = attn - 1000.0 * mask[None]
    attn = jax.nn.softmax(attn, axis=-1)
    attn_out = jnp.einsum("bij,bhj->bhi", attn, v, precision=hp)

    out_f = x_f + jnp.einsum("ch,bht->bct", params["wo"], attn_out, precision=hp)
    h1 = jnp.maximum(
        jnp.einsum("dc,bct->bdt", params["w1"], out_f, precision=hp)
        + params["b1"][None, :, None], 0.0)
    h2 = (jnp.einsum("dc,bct->bdt", params["w2"], h1, precision=hp)
          + params["b2"][None, :, None])
    out_f = out_f + h2
    return out_f.reshape(b, n, c, t).transpose(0, 2, 1, 3)


if __name__ == "__main__":
    key = jax.random.PRNGKey(0)
    b, c, n, t = 2, 32, 4, 16       # batch, in_channels, num_nodes, time
    key_kernel_size = 3             # -> key_padding = chomp_size = 2
    # snorm_bool = tnorm_bool = False  ->  num = 1

    k_x, k_p = jax.random.split(key)
    x = jax.random.normal(k_x, (b, c, n, t), dtype=jnp.float32)
    params = init_params(k_p, c, key_kernel_size)

    out = attention_forward(x, params, key_kernel_size)
    out = jax.block_until_ready(out)
    assert out.shape == (b, c, n, t), out.shape
    assert out.dtype == x.dtype

    ref = jax.block_until_ready(reference_forward(x, params, key_kernel_size))
    max_err = float(jnp.max(jnp.abs(out - ref)))
    # bf16 MXU operands (f32 accumulation / f32 softmax) -> allow 1e-2.
    assert jnp.allclose(out, ref, rtol=1e-2, atol=1e-2), max_err

    print("KERNEL_OK")
</pallas_src>

<mosaic_0001>
module attributes {stable_mosaic.version = 11 : i64} {
  func.func @_attention_kernel(%arg0: i32, %arg1: memref<64x32xf32, #tpu.memory_space<vmem>>, %arg2: memref<64x96xbf16, #tpu.memory_space<vmem>>, %arg3: memref<64x64xf32, #tpu.memory_space<vmem>>, %arg4: memref<96x48xbf16, #tpu.memory_space<vmem>>, %arg5: memref<16x32xbf16, #tpu.memory_space<vmem>>, %arg6: memref<32x32xbf16, #tpu.memory_space<vmem>>, %arg7: memref<1x32xf32, #tpu.memory_space<vmem>>, %arg8: memref<32x32xbf16, #tpu.memory_space<vmem>>, %arg9: memref<1x32xf32, #tpu.memory_space<vmem>>, %arg10: memref<64x32xf32, #tpu.memory_space<vmem>>) attributes {dimension_semantics = [#tpu.dimension_semantics<parallel>], iteration_bounds = array<i64: 2>, scalar_prefetch = 0 : i64, scratch_operands = 0 : i64, tpu.core_type = #tpu.core_type<tc>, window_params = [{transform_indices = @transform_0, window_bounds = array<i64: 64, 32>}, {transform_indices = @transform_1, window_bounds = array<i64: 64, 96>}, {pipeline_mode = #tpu.pipeline_mode<synchronous>, transform_indices = @transform_2, window_bounds = array<i64: 64, 64>}, {pipeline_mode = #tpu.pipeline_mode<synchronous>, transform_indices = @transform_3, window_bounds = array<i64: 96, 48>}, {pipeline_mode = #tpu.pipeline_mode<synchronous>, transform_indices = @transform_4, window_bounds = array<i64: 16, 32>}, {pipeline_mode = #tpu.pipeline_mode<synchronous>, transform_indices = @transform_5, window_bounds = array<i64: 32, 32>}, {pipeline_mode = #tpu.pipeline_mode<synchronous>, transform_indices = @transform_6, window_bounds = array<i64: 1, 32>}, {pipeline_mode = #tpu.pipeline_mode<synchronous>, transform_indices = @transform_7, window_bounds = array<i64: 32, 32>}, {pipeline_mode = #tpu.pipeline_mode<synchronous>, transform_indices = @transform_8, window_bounds = array<i64: 1, 32>}, {transform_indices = @transform_9, window_bounds = array<i64: 64, 32>}]} {
    %c0 = arith.constant 0 : index
    %c0_0 = arith.constant 0 : index
    %0 = vector.load %arg1[%c0, %c0_0] : memref<64x32xf32, #tpu.memory_space<vmem>>, vector<64x32xf32>
    %c0_1 = arith.constant 0 : index
    %c0_2 = arith.constant 0 : index
    %1 = vector.load %arg2[%c0_1, %c0_2] : memref<64x96xbf16, #tpu.memory_space<vmem>>, vector<64x96xbf16>
    %c0_3 = arith.constant 0 : index
    %c0_4 = arith.constant 0 : index
    %2 = vector.load %arg4[%c0_3, %c0_4] : memref<96x48xbf16, #tpu.memory_space<vmem>>, vector<96x48xbf16>
    %cst = arith.constant dense<0.000000e+00> : vector<64x48xf32>
    %3 = tpu.matmul %1, %2, %cst {dimension_numbers = #tpu.dot_dimension_numbers<[1], [0], [0], [1], [0, 0, 1, 1], [], []>} : vector<64x96xbf16>, vector<96x48xbf16>, vector<64x48xf32> -> vector<64x48xf32>
    %4 = vector.extract_strided_slice %3 {offsets = [0, 0], sizes = [64, 16], strides = [1, 1]} : vector<64x48xf32> to vector<64x16xf32>
    %5 = vector.extract_strided_slice %3 {offsets = [0, 16], sizes = [64, 16], strides = [1, 1]} : vector<64x48xf32> to vector<64x16xf32>
    %6 = vector.extract_strided_slice %3 {offsets = [0, 32], sizes = [64, 16], strides = [1, 1]} : vector<64x48xf32> to vector<64x16xf32>
    %cst_5 = arith.constant dense<0.000000e+00> : vector<64x64xf32>
    %7 = tpu.matmul %4, %5, %cst_5 {dimension_numbers = #tpu.dot_dimension_numbers<[1], [1], [0], [0], [0, 0, 1, 0], [], []>} : vector<64x16xf32>, vector<64x16xf32>, vector<64x64xf32> -> vector<64x64xf32>
    %c0_6 = arith.constant 0 : index
    %c0_7 = arith.constant 0 : index
    %8 = vector.load %arg3[%c0_6, %c0_7] : memref<64x64xf32, #tpu.memory_space<vmem>>, vector<64x64xf32>
    %9 = arith.subf %7, %8 : vector<64x64xf32>
    %cst_8 = arith.constant dense<0xFF800000> : vector<64xf32>
    %10 = vector.multi_reduction <maximumf>, %9, %cst_8 [1] : vector<64x64xf32> to vector<64xf32>
    %11 = vector.shape_cast %10 : vector<64xf32> to vector<64x1xf32>
    %12 = vector.broadcast %11 : vector<64x1xf32> to vector<64x64xf32>
    %13 = arith.subf %9, %12 : vector<64x64xf32>
    %14 = math.exp %13 : vector<64x64xf32>
    %cst_9 = arith.constant dense<0.000000e+00> : vector<64xf32>
    %15 = vector.multi_reduction <add>, %14, %cst_9 [1] : vector<64x64xf32> to vector<64xf32>
    %16 = vector.shape_cast %15 : vector<64xf32> to vector<64x1xf32>
    %17 = tpu.reciprocal %16 {approx = true} : vector<64x1xf32> -> vector<64x1xf32>
    %18 = vector.broadcast %17 : vector<64x1xf32> to vector<64x64xf32>
    %19 = arith.mulf %14, %18 : vector<64x64xf32>
    %20 = arith.truncf %19 : vector<64x64xf32> to vector<64x64xbf16>
    %21 = arith.truncf %6 : vector<64x16xf32> to vector<64x16xbf16>
    %cst_10 = arith.constant dense<0.000000e+00> : vector<64x16xf32>
    %22 = tpu.matmul %20, %21, %cst_10 {dimension_numbers = #tpu.dot_dimension_numbers<[1], [0], [0], [1], [0, 0, 1, 1], [], []>} : vector<64x64xbf16>, vector<64x16xbf16>, vector<64x16xf32> -> vector<64x16xf32>
    %23 = arith.truncf %22 : vector<64x16xf32> to vector<64x16xbf16>
    %c0_11 = arith.constant 0 : index
    %c0_12 = arith.constant 0 : index
    %24 = vector.load %arg5[%c0_11, %c0_12] : memref<16x32xbf16, #tpu.memory_space<vmem>>, vector<16x32xbf16>
    %cst_13 = arith.constant dense<0.000000e+00> : vector<64x32xf32>
    %25 = tpu.matmul %23, %24, %cst_13 {dimension_numbers = #tpu.dot_dimension_numbers<[1], [0], [0], [1], [0, 0, 1, 1], [], []>} : vector<64x16xbf16>, vector<16x32xbf16>, vector<64x32xf32> -> vector<64x32xf32>
    %26 = arith.addf %0, %25 : vector<64x32xf32>
    %c0_14 = arith.constant 0 : index
    %c0_15 = arith.constant 0 : index
    %27 = vector.load %arg7[%c0_14, %c0_15] : memref<1x32xf32, #tpu.memory_space<vmem>>, vector<1x32xf32>
    %c0_16 = arith.constant 0 : index
    %c0_17 = arith.constant 0 : index
    %28 = vector.load %arg9[%c0_16, %c0_17] : memref<1x32xf32, #tpu.memory_space<vmem>>, vector<1x32xf32>
    %29 = arith.truncf %26 : vector<64x32xf32> to vector<64x32xbf16>
    %c0_18 = arith.constant 0 : index
    %c0_19 = arith.constant 0 : index
    %30 = vector.load %arg6[%c0_18, %c0_19] : memref<32x32xbf16, #tpu.memory_space<vmem>>, vector<32x32xbf16>
    %cst_20 = arith.constant dense<0.000000e+00> : vector<64x32xf32>
    %31 = tpu.matmul %29, %30, %cst_20 {dimension_numbers = #tpu.dot_dimension_numbers<[1], [0], [0], [1], [0, 0, 1, 1], [], []>} : vector<64x32xbf16>, vector<32x32xbf16>, vector<64x32xf32> -> vector<64x32xf32>
    %32 = vector.broadcast %27 : vector<1x32xf32> to vector<64x32xf32>
    %33 = arith.addf %31, %32 : vector<64x32xf32>
    %cst_21 = arith.constant 0.000000e+00 : f32
    %34 = vector.broadcast %cst_21 : f32 to vector<64x32xf32>
    %35 = arith.maximumf %33, %34 : vector<64x32xf32>
    %36 = arith.truncf %35 : vector<64x32xf32> to vector<64x32xbf16>
    %c0_22 = arith.constant 0 : index
    %c0_23 = arith.constant 0 : index
    %37 = vector.load %arg8[%c0_22, %c0_23] : memref<32x32xbf16, #tpu.memory_space<vmem>>, vector<32x32xbf16>
    %cst_24 = arith.constant dense<0.000000e+00> : vector<64x32xf32>
    %38 = tpu.matmul %36, %37, %cst_24 {dimension_numbers = #tpu.dot_dimension_numbers<[1], [0], [0], [1], [0, 0, 1, 1], [], []>} : vector<64x32xbf16>, vector<32x32xbf16>, vector<64x32xf32> -> vector<64x32xf32>
    %39 = vector.broadcast %28 : vector<1x32xf32> to vector<64x32xf32>
    %40 = arith.addf %38, %39 : vector<64x32xf32>
    %41 = arith.addf %26, %40 : vector<64x32xf32>
    %c0_25 = arith.constant 0 : index
    %c0_26 = arith.constant 0 : index
    %42 = vector.load %arg10[%c0_25, %c0_26] : memref<64x32xf32, #tpu.memory_space<vmem>>, vector<64x32xf32>
    tpu.vector_store %arg10[%c0_25, %c0_26], %41 {strides = array<i32>} : memref<64x32xf32, #tpu.memory_space<vmem>>, vector<64x32xf32>,
    return
  }
  func.func @transform_0(%arg0: i32) -> (i32, i32) {
    %c0_i32 = arith.constant 0 : i32
    %c0_i32_0 = arith.constant 0 : i32
    return %arg0, %c0_i32 : i32, i32
  }
  func.func @transform_1(%arg0: i32) -> (i32, i32) {
    %c0_i32 = arith.constant 0 : i32
    %c0_i32_0 = arith.constant 0 : i32
    return %arg0, %c0_i32 : i32, i32
  }
  func.func @transform_2(%arg0: i32) -> (i32, i32) {
    %c0_i32 = arith.constant 0 : i32
    %c0_i32_0 = arith.constant 0 : i32
    %c0_i32_1 = arith.constant 0 : i32
    return %c0_i32, %c0_i32_0 : i32, i32
  }
  func.func @transform_3(%arg0: i32) -> (i32, i32) {
    %c0_i32 = arith.constant 0 : i32
    %c0_i32_0 = arith.constant 0 : i32
    %c0_i32_1 = arith.constant 0 : i32
    return %c0_i32, %c0_i32_0 : i32, i32
  }
  func.func @transform_4(%arg0: i32) -> (i32, i32) {
    %c0_i32 = arith.constant 0 : i32
    %c0_i32_0 = arith.constant 0 : i32
    %c0_i32_1 = arith.constant 0 : i32
    return %c0_i32, %c0_i32_0 : i32, i32
  }
  func.func @transform_5(%arg0: i32) -> (i32, i32) {
    %c0_i32 = arith.constant 0 : i32
    %c0_i32_0 = arith.constant 0 : i32
    %c0_i32_1 = arith.constant 0 : i32
    return %c0_i32, %c0_i32_0 : i32, i32
  }
  func.func @transform_6(%arg0: i32) -> (i32, i32) {
    %c0_i32 = arith.constant 0 : i32
    %c0_i32_0 = arith.constant 0 : i32
    %c0_i32_1 = arith.constant 0 : i32
    return %c0_i32, %c0_i32_0 : i32, i32
  }
  func.func @transform_7(%arg0: i32) -> (i32, i32) {
    %c0_i32 = arith.constant 0 : i32
    %c0_i32_0 = arith.constant 0 : i32
    %c0_i32_1 = arith.constant 0 : i32
    return %c0_i32, %c0_i32_0 : i32, i32
  }
  func.func @transform_8(%arg0: i32) -> (i32, i32) {
    %c0_i32 = arith.constant 0 : i32
    %c0_i32_0 = arith.constant 0 : i32
    %c0_i32_1 = arith.constant 0 : i32
    return %c0_i32, %c0_i32_0 : i32, i32
  }
  func.func @transform_9(%arg0: i32) -> (i32, i32) {
    %c0_i32 = arith.constant 0 : i32
    %c0_i32_0 = arith.constant 0 : i32
    return %arg0, %c0_i32 : i32, i32
  }
}

</mosaic_0001>

<llo_original>
// kernel: attention_forward.1
$region0: #{attention_forward.1}
  #allocation0 [shape = 'u32[]', space=smem, size = 0x4, offset = 0x4, fixed_abs, tag = 'smem constant byte address 0x4 - core index']
  #allocation1 [shape = 'u32[72,128]{1,0:T(1,128)}', space=vmem, size = 0x9000, scoped, tag = 'internal scratch']
  %s0 = inlined_call_operand.vmem [shape: f32[128,32], index: 0, kind: input, shape index: {}]
  %s1 = inlined_call_operand.vmem [shape: bf16[128,96], index: 1, kind: input, shape index: {}]
  %s2 = inlined_call_operand.vmem [shape: f32[64,64], index: 2, kind: input, shape index: {}]
  %s3 = inlined_call_operand.vmem [shape: bf16[96,48], index: 3, kind: input, shape index: {}]
  %s4 = inlined_call_operand.vmem [shape: bf16[16,32], index: 4, kind: input, shape index: {}]
  %s5 = inlined_call_operand.vmem [shape: bf16[32,32], index: 5, kind: input, shape index: {}]
  %s6 = inlined_call_operand.vmem [shape: f32[1,32], index: 6, kind: input, shape index: {}]
  %s7 = inlined_call_operand.vmem [shape: bf16[32,32], index: 7, kind: input, shape index: {}]
  %s8 = inlined_call_operand.vmem [shape: f32[1,32], index: 8, kind: input, shape index: {}]
  %s9 = inlined_call_operand.hbm [shape: f32[128,32], index: 9, kind: output, shape index: {}]
  %s10 = sld [smem:[#allocation0]]
  $region69: #{attention_forward.1} parent=0
    _
  %s12 = ssub.s32 1, %s10
  %s13 = scalar_select 0, %s12, %s10
  $region1: #{attention_forward.1} parent=0
    #allocation2 [shape = 'u8[65536]{0}', space=vmem, size = 0x10000, scoped, tag = 'output window, operand 0']
    #allocation3 [shape = 's32[2]{0}', space=sflag, size = 0x8, scoped, tag = 'scoped memory for attention_forward.1']
    %14 = vsyncpa [#allocation3], 0
    %s15 = scalar_lea.sflag [#allocation3], 1
    %16 = vsyncpa %s15, 0
    loop: start=0, step=1, limit=4
    $region2: #{attention_forward.1} parent=1 // loop_pre_header
      _
    $region3: #{attention_forward.1} parent=1 // loop_header
      %s18 = sphi 0, %s22
      %p19 = scmp.ge.s32.totalorder %s18, 4
      %s28 = sphi 0, %s30
      %s31 = sphi 0, %s28
      %s32 = sphi 0, %s31
      %s48 = sphi 0, %s32
      %s54 = sphi 0, %s56
      %s57 = sphi 0, %s54
      %s58 = sphi 0, %s57
      %s74 = sphi 0, %s58
      %s78 = sphi 0, %s78
      %s80 = sphi 0, %s78
      %s81 = sphi 0, %s80
      %s95 = sphi 0, %s81
      %s99 = sphi 0, %s99
      %s101 = sphi 0, %s99
      %s102 = sphi 0, %s101
      %s116 = sphi 0, %s102
      %s120 = sphi 0, %s120
      %s122 = sphi 0, %s120
      %s123 = sphi 0, %s122
      %s137 = sphi 0, %s123
      %s141 = sphi 0, %s141
      %s143 = sphi 0, %s141
      %s144 = sphi 0, %s143
      %s158 = sphi 0, %s144
      %s162 = sphi 0, %s162
      %s164 = sphi 0, %s162
      %s165 = sphi 0, %s164
      %s179 = sphi 0, %s165
      %s183 = sphi 0, %s183
      %s185 = sphi 0, %s183
      %s186 = sphi 0, %s185
      %s200 = sphi 0, %s186
      %s204 = sphi 0, %s204
      %s206 = sphi 0, %s204
      %s207 = sphi 0, %s206
      %s221 = sphi 0, %s207
      %s227 = sphi 0, %s229
      %s230 = sphi 0, %s227
      %s231 = sphi 0, %s230
      %s247 = sphi 0, %s231
    $region4: #{attention_forward.1} parent=1 // loop_header_branch
      %21 = sbr.rel (%p19) target = $region8
    $region5: #{attention_forward.1} parent=1 // loop_body
      %s23 = ssub.s32 %s18, 1
      %s24 = ssub.s32 %s18, 2
      %s25 = sadd.s32 %s18, 1
      %s26 = ssub.s32 %s18, %s25
      %p27 = scmp.eq.s32.totalorder %s26, 0
      %s29 = sadd.s32 %s28, 1
      %s30 = scalar_select %p27, %s28, %s29
      %p33 = pneg %p27
      %p34 = scmp.eq.s32.totalorder %s18, 1
      %p35 = por %p33, %p34
      %p36 = scmp.ne.s32.totalorder %s28, %s31
      %p37 = scmp.eq.s32.totalorder %s18, 0
      %p38 = por %p36, %p37
      %p39 = scmp.ne.s32.totalorder %s28, %s31
      %p40 = scmp.eq.s32.totalorder %s23, 1
      %p41 = por %p39, %p40
      %p42 = scmp.ne.s32.totalorder %s31, %s32
      %p43 = scmp.eq.s32.totalorder %s23, 0
      %p44 = por %p42, %p43
      %p45 = scmp.ne.s32.totalorder %s31, %s32
      %p46 = scmp.eq.s32.totalorder %s24, 1
      %p47 = por %p45, %p46
      %p49 = scmp.ne.s32.totalorder %s32, %s48
      %p50 = scmp.eq.s32.totalorder %s24, 0
      %p51 = por %p49, %p50
      %s52 = ssub.s32 %s18, %s25
      %p53 = scmp.eq.s32.totalorder %s52, 0
      %s55 = sadd.s32 %s54, 1
      %s56 = scalar_select %p53, %s54, %s55
      %p59 = pneg %p53
      %p60 = scmp.eq.s32.totalorder %s18, 1
      %p61 = por %p59, %p60
      %p62 = scmp.ne.s32.totalorder %s54, %s57
      %p63 = scmp.eq.s32.totalorder %s18, 0
      %p64 = por %p62, %p63
      %p65 = scmp.ne.s32.totalorder %s54, %s57
      %p66 = scmp.eq.s32.totalorder %s23, 1
      %p67 = por %p65, %p66
      %p68 = scmp.ne.s32.totalorder %s57, %s58
      %p69 = scmp.eq.s32.totalorder %s23, 0
      %p70 = por %p68, %p69
      %p71 = scmp.ne.s32.totalorder %s57, %s58
      %p72 = scmp.eq.s32.totalorder %s24, 1
      %p73 = por %p71, %p72
      %p75 = scmp.ne.s32.totalorder %s58, %s74
      %p76 = scmp.eq.s32.totalorder %s24, 0
      %p77 = por %p75, %p76
      %s79 = sadd.s32 %s78, 1
      %p82 = scmp.eq.s32.totalorder %s18, 1
      %p83 = scmp.ne.s32.totalorder %s78, %s80
      %p84 = scmp.eq.s32.totalorder %s18, 0
      %p85 = por %p83, %p84
      %p86 = scmp.ne.s32.totalorder %s78, %s80
      %p87 = scmp.eq.s32.totalorder %s23, 1
      %p88 = por %p86, %p87
      %p89 = scmp.ne.s32.totalorder %s80, %s81
      %p90 = scmp.eq.s32.totalorder %s23, 0
      %p91 = por %p89, %p90
      %p92 = scmp.ne.s32.totalorder %s80, %s81
      %p93 = scmp.eq.s32.totalorder %s24, 1
      %p94 = por %p92, %p93
      %p96 = scmp.ne.s32.totalorder %s81, %s95
      %p97 = scmp.eq.s32.totalorder %s24, 0
      %p98 = por %p96, %p97
      %s100 = sadd.s32 %s99, 1
      %p103 = scmp.eq.s32.totalorder %s18, 1
      %p104 = scmp.ne.s32.totalorder %s99, %s101
      %p105 = scmp.eq.s32.totalorder %s18, 0
      %p106 = por %p104, %p105
      %p107 = scmp.ne.s32.totalorder %s99, %s101
      %p108 = scmp.eq.s32.totalorder %s23, 1
      %p109 = por %p107, %p108
      %p110 = scmp.ne.s32.totalorder %s101, %s102
      %p111 = scmp.eq.s32.totalorder %s23, 0
      %p112 = por %p110, %p111
      %p113 = scmp.ne.s32.totalorder %s101, %s102
      %p114 = scmp.eq.s32.totalorder %s24, 1
      %p115 = por %p113, %p114
      %p117 = scmp.ne.s32.totalorder %s102, %s116
      %p118 = scmp.eq.s32.totalorder %s24, 0
      %p119 = por %p117, %p118
      %s121 = sadd.s32 %s120, 1
      %p124 = scmp.eq.s32.totalorder %s18, 1
      %p125 = scmp.ne.s32.totalorder %s120, %s122
      %p126 = scmp.eq.s32.totalorder %s18, 0
      %p127 = por %p125, %p126
      %p128 = scmp.ne.s32.totalorder %s120, %s122
      %p129 = scmp.eq.s32.totalorder %s23, 1
      %p130 = por %p128, %p129
      %p131 = scmp.ne.s32.totalorder %s122, %s123
      %p132 = scmp.eq.s32.totalorder %s23, 0
      %p133 = por %p131, %p132
      %p134 = scmp.ne.s32.totalorder %s122, %s123
      %p135 = scmp.eq.s32.totalorder %s24, 1
      %p136 = por %p134, %p135
      %p138 = scmp.ne.s32.totalorder %s123, %s137
      %p139 = scmp.eq.s32.totalorder %s24, 0
      %p140 = por %p138, %p139
      %s142 = sadd.s32 %s141, 1
      %p145 = scmp.eq.s32.totalorder %s18, 1
      %p146 = scmp.ne.s32.totalorder %s141, %s143
      %p147 = scmp.eq.s32.totalorder %s18, 0
      %p148 = por %p146, %p147
      %p149 = scmp.ne.s32.totalorder %s141, %s143
      %p150 = scmp.eq.s32.totalorder %s23, 1
      %p151 = por %p149, %p150
      %p152 = scmp.ne.s32.totalorder %s143, %s144
      %p153 = scmp.eq.s32.totalorder %s23, 0
      %p154 = por %p152, %p153
      %p155 = scmp.ne.s32.totalorder %s143, %s144
      %p156 = scmp.eq.s32.totalorder %s24, 1
      %p157 = por %p155, %p156
      %p159 = scmp.ne.s32.totalorder %s144, %s158
      %p160 = scmp.eq.s32.totalorder %s24, 0
      %p161 = por %p159, %p160
      %s163 = sadd.s32 %s162, 1
      %p166 = scmp.eq.s32.totalorder %s18, 1
      %p167 = scmp.ne.s32.totalorder %s162, %s164
      %p168 = scmp.eq.s32.totalorder %s18, 0
      %p169 = por %p167, %p168
      %p170 = scmp.ne.s32.totalorder %s162, %s164
      %p171 = scmp.eq.s32.totalorder %s23, 1
      %p172 = por %p170, %p171
      %p173 = scmp.ne.s32.totalorder %s164, %s165
      %p174 = scmp.eq.s32.totalorder %s23, 0
      %p175 = por %p173, %p174
      %p176 = scmp.ne.s32.totalorder %s164, %s165
      %p177 = scmp.eq.s32.totalorder %s24, 1
      %p178 = por %p176, %p177
      %p180 = scmp.ne.s32.totalorder %s165, %s179
      %p181 = scmp.eq.s32.totalorder %s24, 0
      %p182 = por %p180, %p181
      %s184 = sadd.s32 %s183, 1
      %p187 = scmp.eq.s32.totalorder %s18, 1
      %p188 = scmp.ne.s32.totalorder %s183, %s185
      %p189 = scmp.eq.s32.totalorder %s18, 0
      %p190 = por %p188, %p189
      %p191 = scmp.ne.s32.totalorder %s183, %s185
      %p192 = scmp.eq.s32.totalorder %s23, 1
      %p193 = por %p191, %p192
      %p194 = scmp.ne.s32.totalorder %s185, %s186
      %p195 = scmp.eq.s32.totalorder %s23, 0
      %p196 = por %p194, %p195
      %p197 = scmp.ne.s32.totalorder %s185, %s186
      %p198 = scmp.eq.s32.totalorder %s24, 1
      %p199 = por %p197, %p198
      %p201 = scmp.ne.s32.totalorder %s186, %s200
      %p202 = scmp.eq.s32.totalorder %s24, 0
      %p203 = por %p201, %p202
      %s205 = sadd.s32 %s204, 1
      %p208 = scmp.eq.s32.totalorder %s18, 1
      %p209 = scmp.ne.s32.totalorder %s204, %s206
      %p210 = scmp.eq.s32.totalorder %s18, 0
      %p211 = por %p209, %p210
      %p212 = scmp.ne.s32.totalorder %s204, %s206
      %p213 = scmp.eq.s32.totalorder %s23, 1
      %p214 = por %p212, %p213
      %p215 = scmp.ne.s32.totalorder %s206, %s207
      %p216 = scmp.eq.s32.totalorder %s23, 0
      %p217 = por %p215, %p216
      %p218 = scmp.ne.s32.totalorder %s206, %s207
      %p219 = scmp.eq.s32.totalorder %s24, 1
      %p220 = por %p218, %p219
      %p222 = scmp.ne.s32.totalorder %s207, %s221
      %p223 = scmp.eq.s32.totalorder %s24, 0
      %p224 = por %p222, %p223
      %s225 = ssub.s32 %s18, %s25
      %p226 = scmp.eq.s32.totalorder %s225, 0
      %s228 = sadd.s32 %s227, 1
      %s229 = scalar_select %p226, %s227, %s228
      %p232 = pneg %p226
      %p233 = scmp.eq.s32.totalorder %s18, 1
      %p234 = por %p232, %p233
      %p235 = scmp.ne.s32.totalorder %s227, %s230
      %p236 = scmp.eq.s32.totalorder %s18, 0
      %p237 = por %p235, %p236
      %p238 = scmp.ne.s32.totalorder %s227, %s230
      %p239 = scmp.eq.s32.totalorder %s23, 1
      %p240 = por %p238, %p239
      %p241 = scmp.ne.s32.totalorder %s230, %s231
      %p242 = scmp.eq.s32.totalorder %s23, 0
      %p243 = por %p241, %p242
      %p244 = scmp.ne.s32.totalorder %s230, %s231
      %p245 = scmp.eq.s32.totalorder %s24, 1
      %p246 = por %p244, %p245
      %p248 = scmp.ne.s32.totalorder %s231, %s247
      %p249 = scmp.eq.s32.totalorder %s24, 0
      %p250 = por %p248, %p249
      %p251 = scmp.le.s32.totalorder 1, %s18
      %p252 = scmp.lt.s32.totalorder %s18, 3
      %p253 = pnand %p251, %p252
      %p254 = pneg %p253
      // Predicated region
      $region9: #{attention_forward.1} parent=5 // pred_check
        _
      $region10: #{attention_forward.1} parent=5 // pred_check_branch
        %256 = sbr.rel (%p253) target = $region12
      $region11: #{attention_forward.1} parent=5 // pred_region
        %s257 = ssub.s32 %s18, 1
        // Predicated region
        $region13: #{attention_forward.1} parent=11 // pred_check
          %p258 = pneg %p91
        $region14: #{attention_forward.1} parent=11 // pred_check_branch
          %260 = sbr.rel (%p258) target = $region16
        $region15: #{attention_forward.1} parent=11 // pred_region
          _
        $region16: #{attention_forward.1} parent=11 // pred_fallthru
          _
        // Predicated region
        $region17: #{attention_forward.1} parent=11 // pred_check
          %p261 = pneg %p112
        $region18: #{attention_forward.1} parent=11 // pred_check_branch
          %263 = sbr.rel (%p261) target = $region20
        $region19: #{attention_forward.1} parent=11 // pred_region
          _
        $region20: #{attention_forward.1} parent=11 // pred_fallthru
          _
        // Predicated region
        $region21: #{attention_forward.1} parent=11 // pred_check
          %p264 = pneg %p133
        $region22: #{attention_forward.1} parent=11 // pred_check_branch
          %266 = sbr.rel (%p264) target = $region24
        $region23: #{attention_forward.1} parent=11 // pred_region
          _
        $region24: #{attention_forward.1} parent=11 // pred_fallthru
          _
        // Predicated region
        $region25: #{attention_forward.1} parent=11 // pred_check
          %p267 = pneg %p154
        $region26: #{attention_forward.1} parent=11 // pred_check_branch
          %269 = sbr.rel (%p267) target = $region28
        $region27: #{attention_forward.1} parent=11 // pred_region
          _
        $region28: #{attention_forward.1} parent=11 // pred_fallthru
          _
        // Predicated region
        $region29: #{attention_forward.1} parent=11 // pred_check
          %p270 = pneg %p175
        $region30: #{attention_forward.1} parent=11 // pred_check_branch
          %272 = sbr.rel (%p270) target = $region32
        $region31: #{attention_forward.1} parent=11 // pred_region
          _
        $region32: #{attention_forward.1} parent=11 // pred_fallthru
          _
        // Predicated region
        $region33: #{attention_forward.1} parent=11 // pred_check
          %p273 = pneg %p196
        $region34: #{attention_forward.1} parent=11 // pred_check_branch
          %275 = sbr.rel (%p273) target = $region36
        $region35: #{attention_forward.1} parent=11 // pred_region
          _
        $region36: #{attention_forward.1} parent=11 // pred_fallthru
          _
        // Predicated region
        $region37: #{attention_forward.1} parent=11 // pred_check
          %p276 = pneg %p217
        $region38: #{attention_forward.1} parent=11 // pred_check_branch
          %278 = sbr.rel (%p276) target = $region40
        $region39: #{attention_forward.1} parent=11 // pred_region
          _
        $region40: #{attention_forward.1} parent=11 // pred_fallthru
          _
      $region12: #{attention_forward.1} parent=5 // pred_fallthru
        _
      %p279 = scmp.lt.s32.totalorder %s18, 2
      // Predicated region
      $region41: #{attention_forward.1} parent=5 // pred_check
        %p280 = pneg %p279
      $region42: #{attention_forward.1} parent=5 // pred_check_branch
        %282 = sbr.rel (%p280) target = $region44
      $region43: #{attention_forward.1} parent=5 // pred_region
        // Predicated region
        $region45: #{attention_forward.1} parent=43 // pred_check
          %p283 = pneg %p38
        $region46: #{attention_forward.1} parent=43 // pred_check_branch
          %285 = sbr.rel (%p283) target = $region48
        $region47: #{attention_forward.1} parent=43 // pred_region
          %s286 = smul.u32 8, %s18
          %p287 = scmp.lt.s32.totalorder %s286, 15
          %s288 = scalar_select %p287, %s286, 15
          %s289 = smul.addr %s288, 8
          %s290 = scalar_lea.vmem %s0, %s289
          %s291 = smul.u32 8, %s18
        $region48: #{attention_forward.1} parent=43 // pred_fallthru
          _
        // Predicated region
        $region49: #{attention_forward.1} parent=43 // pred_check
          %p292 = pneg %p64
        $region50: #{attention_forward.1} parent=43 // pred_check_branch
          %294 = sbr.rel (%p292) target = $region52
        $region51: #{attention_forward.1} parent=43 // pred_region
          %s295 = smul.u32 8, %s18
          %p296 = scmp.lt.s32.totalorder %s295, 15
          %s297 = scalar_select %p296, %s295, 15
          %s298 = smul.addr %s297, 4
          %s299 = scalar_lea.vmem %s1, %s298
          %s300 = smul.u32 8, %s18
        $region52: #{attention_forward.1} parent=43 // pred_fallthru
          _
      $region44: #{attention_forward.1} parent=5 // pred_fallthru
        _
      %p301 = scmp.le.s32.totalorder 1, %s18
      %p302 = scmp.lt.s32.totalorder %s18, 3
      %p303 = pnand %p301, %p302
      %p304 = pneg %p303
      // Predicated region
      $region53: #{attention_forward.1} parent=5 // pred_check
        _
      $region54: #{attention_forward.1} parent=5 // pred_check_branch
        %306 = sbr.rel (%p303) target = $region56
      $region55: #{attention_forward.1} parent=5 // pred_region
        %s307 = ssub.s32 %s18, 1
        %s308 = smul.u32 8, %s23
        %p309 = scmp.lt.s32.totalorder %s308, 15
        %s310 = scalar_select %p309, %s308, 15
        %s311 = smul.addr %s310, 8
        %s312 = scalar_lea.vmem %s0, %s311
        %p313 = pneg %p44
        %p314 = pneg %p41
        %s315 = smul.u32 8, %s23
        %p316 = scmp.lt.s32.totalorder %s315, 15
        %s317 = scalar_select %p316, %s315, 15
        %s318 = smul.addr %s317, 4
        %s319 = scalar_lea.vmem %s1, %s318
        %p320 = pneg %p70
        %p321 = pneg %p67
        %p322 = pneg %p91
        %p323 = pneg %p88
        %p324 = pneg %p112
        %p325 = pneg %p109
        %p326 = pneg %p133
        %p327 = pneg %p130
        %p328 = pneg %p154
        %p329 = pneg %p151
        %p330 = pneg %p175
        %p331 = pneg %p172
        %p332 = pneg %p196
        %p333 = pneg %p193
        %p334 = pneg %p217
        %p335 = pneg %p214
        %p336 = pneg %p243
        %p337 = pneg %p240
        %s338 = sand.u32 %s230, 1
        %s339 = scalar_lea.sflag [#allocation3], %s338
        %s340 = sand.u32 %s230, 1
        %s341 = smul.addr %s340, 64
        %s342 = scalar_lea.vmem [#allocation2], %s341
        %s343 = smul.u32 8, %s23
        %p344 = scmp.lt.s32.totalorder %s343, 15
        %s345 = scalar_select %p344, %s343, 15
        %s346 = smul.addr %s345, 8
        %s347 = scalar_lea.vmem %s0, %s346
        %s348 = smul.u32 8, %s23
        %s349 = smul.u32 8, %s23
        %p350 = scmp.lt.s32.totalorder %s349, 15
        %s351 = scalar_select %p350, %s349, 15
        %s352 = smul.addr %s351, 4
        %s353 = scalar_lea.vmem %s1, %s352
        %s354 = smul.u32 8, %s23
        %s355 = smul.u32 8, %s23
        %v357 = vld [vmem:[%s347] sm:$0xff]
        %v358 = vld [vmem:[%s347 + $0x8] sm:$0xff]
        %v359 = vld [vmem:[%s347 + $0x10] sm:$0xff]
        %v360 = vld [vmem:[%s347 + $0x18] sm:$0xff]
        %v361 = vld [vmem:[%s347 + $0x20] sm:$0xff]
        %v362 = vld [vmem:[%s347 + $0x28] sm:$0xff]
        %v363 = vld [vmem:[%s347 + $0x30] sm:$0xff]
        %v364 = vld [vmem:[%s347 + $0x38] sm:$0xff]
        %v365 = vld [vmem:[%s353] sm:$0xf]
        %v366 = vld [vmem:[%s353 + $0x4] sm:$0xf]
        %v367 = vld [vmem:[%s353 + $0x8] sm:$0xf]
        %v368 = vld [vmem:[%s353 + $0xc] sm:$0xf]
        %v369 = vld [vmem:[%s353 + $0x10] sm:$0xf]
        %v370 = vld [vmem:[%s353 + $0x14] sm:$0xf]
        %v371 = vld [vmem:[%s353 + $0x18] sm:$0xf]
        %v372 = vld [vmem:[%s353 + $0x1c] sm:$0xf]
        %v373 = vld [vmem:[%s3] sm:$0xf]
        %v374 = vld [vmem:[%s3 + $0x4] sm:$0xf]
        %v375 = vld [vmem:[%s3 + $0x8] sm:$0xf]
        %v376 = vld [vmem:[%s3 + $0xc] sm:$0xf]
        %v377 = vld [vmem:[%s3 + $0x10] sm:$0xf]
        %v378 = vld [vmem:[%s3 + $0x14] sm:$0xf]
        %v379 = vld [vmem:[%s3 + $0x18] sm:$0xf]
        %v380 = vld [vmem:[%s3 + $0x1c] sm:$0xf]
        %v381 = vld [vmem:[%s3 + $0x20] sm:$0xf]
        %v382 = vld [vmem:[%s3 + $0x24] sm:$0xf]
        %v383 = vld [vmem:[%s3 + $0x28] sm:$0xf]
        %v384 = vld [vmem:[%s3 + $0x2c] sm:$0xf]
        %v393 = vunpack.c.l.b16 %v365
        %v394 = vunpack.c.l.b16 %v366
        %v395 = vunpack.c.l.b16 %v367
        %v396 = vunpack.c.l.b16 %v368
        %v397 = vunpack.c.l.b16 %v369
        %v398 = vunpack.c.l.b16 %v370
        %v399 = vunpack.c.l.b16 %v371
        %v400 = vunpack.c.l.b16 %v372
        %v401 = vpack.c.b16 %v394, %v393
        %v402 = vpack.c.b16 %v396, %v395
        %v403 = vpack.c.b16 %v398, %v397
        %v404 = vpack.c.b16 %v400, %v399
        %v417 = vunpack.c.l.b16 %v373
        %v418 = vunpack.c.l.b16 %v374
        %v419 = vunpack.c.l.b16 %v375
        %v420 = vunpack.c.l.b16 %v376
        %v421 = vunpack.c.l.b16 %v377
        %v422 = vunpack.c.l.b16 %v378
        %v423 = vunpack.c.l.b16 %v379
        %v424 = vunpack.c.l.b16 %v380
        %v425 = vunpack.c.l.b16 %v381
        %v426 = vunpack.c.l.b16 %v382
        %v427 = vunpack.c.l.b16 %v383
        %v428 = vunpack.c.l.b16 %v384
        %v429 = vpack.c.b16 %v418, %v417
        %v430 = vpack.c.b16 %v420, %v419
        %v431 = vpack.c.b16 %v422, %v421
        %v432 = vpack.c.b16 %v424, %v423
        %v433 = vpack.c.b16 %v426, %v425
        %v434 = vpack.c.b16 %v428, %v427
        %vm441 = vcmask 785408
        %v443 = vsel %vm441, %v401, 0
        %v446 = vsel %vm441, %v402, 0
        %v449 = vsel %vm441, %v403, 0
        %v452 = vsel %vm441, %v404, 0
        %454 = vmatpush.bf16.msra.mxu0 0
        %455 = vmatpush.bf16.msra.mxu0 0
        %456 = vmatpush.bf16.msra.mxu0 %v434
        %457 = vmatpush.bf16.msra.mxu0 %v433
        %458 = vmatpush.bf16.msra.mxu0 %v432
        %459 = vmatpush.bf16.msra.mxu0 %v431
        %460 = vmatpush.bf16.msra.mxu0 %v430
        %461 = vmatpush.bf16.msra.mxu0 %v429
        %462 = vmatmul.bf16.gmra.mxu0 %v443
        %v463 = vpop.f32.mrf.mxu0
        %v464 = vadd.f32 0.0, %v463
        %v465 = vpop.f32.mrf.mxu0
        %v466 = vadd.f32 0.0, %v465
        %467 = vmatmul.bf16.gmra.mxu0 %v446
        %v468 = vpop.f32.mrf.mxu0
        %v469 = vadd.f32 0.0, %v468
        %v470 = vpop.f32.mrf.mxu0
        %v471 = vadd.f32 0.0, %v470
        %472 = vmatmul.bf16.gmra.mxu0 %v449
        %v473 = vpop.f32.mrf.mxu0
        %v474 = vadd.f32 0.0, %v473
        %v475 = vpop.f32.mrf.mxu0
        %v476 = vadd.f32 0.0, %v475
        %477 = vmatmul.bf16.gmra.mxu0 %v452
        %v478 = vpop.f32.mrf.mxu0
        %v479 = vadd.f32 0.0, %v478
        %v480 = vpop.f32.mrf.mxu0
        %v481 = vadd.f32 0.0, %v480
        %482 = vdwg.mxu0
        %491 = vrot.lane.b32.xlu0 %v464, 112
        %v492 = vpop.permute.xlu0 %491
        %493 = vrot.lane.b32.xlu0 %v466, 112
        %v494 = vpop.permute.xlu0 %493
        %495 = vrot.lane.b32.xlu0 %v469, 112
        %v496 = vpop.permute.xlu0 %495
        %497 = vrot.lane.b32.xlu0 %v471, 112
        %v498 = vpop.permute.xlu0 %497
        %499 = vrot.lane.b32.xlu0 %v474, 112
        %v500 = vpop.permute.xlu0 %499
        %501 = vrot.lane.b32.xlu0 %v476, 112
        %v502 = vpop.permute.xlu0 %501
        %503 = vrot.lane.b32.xlu0 %v479, 112
        %v504 = vpop.permute.xlu0 %503
        %505 = vrot.lane.b32.xlu0 %v481, 112
        %v506 = vpop.permute.xlu0 %505
        %vm507 = vcmask 130048
        %v508 = vsel %vm507, %v464, 0
        %v510 = vsel %vm507, %v466, 0
        %v512 = vsel %vm507, %v469, 0
        %v514 = vsel %vm507, %v471, 0
        %v516 = vsel %vm507, %v474, 0
        %v518 = vsel %vm507, %v476, 0
        %v520 = vsel %vm507, %v479, 0
        %v522 = vsel %vm507, %v481, 0
        %v524 = vsel %vm507, %v492, 0
        %v526 = vsel %vm507, %v494, 0
        %v528 = vsel %vm507, %v496, 0
        %v530 = vsel %vm507, %v498, 0
        %v532 = vsel %vm507, %v500, 0
        %v534 = vsel %vm507, %v502, 0
        %v536 = vsel %vm507, %v504, 0
        %v538 = vsel %vm507, %v506, 0
        %540 = vmatpush.xpose.msra.mxu0 0.0
        %541 = vmatpush.xpose.msra.mxu0 0.0
        %542 = vmatpush.xpose.msra.mxu0 0.0
        %543 = vmatpush.xpose.msra.mxu0 0.0
        %544 = vmatpush.xpose.msra.mxu0 0.0
        %545 = vmatpush.xpose.msra.mxu0 0.0
        %546 = vmatpush.xpose.msra.mxu0 0.0
        %547 = vmatpush.xpose.msra.mxu0 0.0
        %548 = vmatpush.xpose.msra.mxu0 %v538
        %549 = vmatpush.xpose.msra.mxu0 %v536
        %550 = vmatpush.xpose.msra.mxu0 %v534
        %551 = vmatpush.xpose.msra.mxu0 %v532
        %552 = vmatpush.xpose.msra.mxu0 %v530
        %553 = vmatpush.xpose.msra.mxu0 %v528
        %554 = vmatpush.xpose.msra.mxu0 %v526
        %555 = vmatpush.xpose.msra.mxu0 %v524
        %556 = vmatmul.f32.gmra.mxu0 %v508
        %v557 = vpop.f32.mrf.mxu0
        %v558 = vadd.f32 0.0, %v557
        %559 = vmatmul.f32.gmra.mxu0 %v510
        %v560 = vpop.f32.mrf.mxu0
        %v561 = vadd.f32 0.0, %v560
        %562 = vmatmul.f32.gmra.mxu0 %v512
        %v563 = vpop.f32.mrf.mxu0
        %v564 = vadd.f32 0.0, %v563
        %565 = vmatmul.f32.gmra.mxu0 %v514
        %v566 = vpop.f32.mrf.mxu0
        %v567 = vadd.f32 0.0, %v566
        %568 = vmatmul.f32.gmra.mxu0 %v516
        %v569 = vpop.f32.mrf.mxu0
        %v570 = vadd.f32 0.0, %v569
        %571 = vmatmul.f32.gmra.mxu0 %v518
        %v572 = vpop.f32.mrf.mxu0
        %v573 = vadd.f32 0.0, %v572
        %574 = vmatmul.f32.gmra.mxu0 %v520
        %v575 = vpop.f32.mrf.mxu0
        %v576 = vadd.f32 0.0, %v575
        %577 = vmatmul.f32.gmra.mxu0 %v522
        %v578 = vpop.f32.mrf.mxu0
        %v579 = vadd.f32 0.0, %v578
        %580 = vdwg.mxu0
        %v581 = vld [vmem:[%s2] sm:$0xff]
        %v582 = vld [vmem:[%s2 + $0x8] sm:$0xff]
        %v583 = vld [vmem:[%s2 + $0x10] sm:$0xff]
        %v584 = vld [vmem:[%s2 + $0x18] sm:$0xff]
        %v585 = vld [vmem:[%s2 + $0x20] sm:$0xff]
        %v586 = vld [vmem:[%s2 + $0x28] sm:$0xff]
        %v587 = vld [vmem:[%s2 + $0x30] sm:$0xff]
        %v588 = vld [vmem:[%s2 + $0x38] sm:$0xff]
        %v589 = vsub.f32 %v558, %v581
        %v590 = vsub.f32 %v561, %v582
        %v591 = vsub.f32 %v564, %v583
        %v592 = vsub.f32 %v567, %v584
        %v593 = vsub.f32 %v570, %v585
        %v594 = vsub.f32 %v573, %v586
        %v595 = vsub.f32 %v576, %v587
        %v596 = vsub.f32 %v579, %v588
        %vm597 = vcmask 523264
        %v598 = vsel %vm597, %v589, -inf
        %599 = vmax.xlane.f32.xlu0 %v598
        %v600 = vpop.xlane.xlu0 %599
        %v601 = vsel %vm597, %v590, -inf
        %602 = vmax.xlane.f32.xlu0 %v601
        %v603 = vpop.xlane.xlu0 %602
        %v604 = vsel %vm597, %v591, -inf
        %605 = vmax.xlane.f32.xlu0 %v604
        %v606 = vpop.xlane.xlu0 %605
        %v607 = vsel %vm597, %v592, -inf
        %608 = vmax.xlane.f32.xlu0 %v607
        %v609 = vpop.xlane.xlu0 %608
        %v610 = vsel %vm597, %v593, -inf
        %611 = vmax.xlane.f32.xlu0 %v610
        %v612 = vpop.xlane.xlu0 %611
        %v613 = vsel %vm597, %v594, -inf
        %614 = vmax.xlane.f32.xlu0 %v613
        %v615 = vpop.xlane.xlu0 %614
        %v616 = vsel %vm597, %v595, -inf
        %617 = vmax.xlane.f32.xlu0 %v616
        %v618 = vpop.xlane.xlu0 %617
        %v619 = vsel %vm597, %v596, -inf
        %620 = vmax.xlane.f32.xlu0 %v619
        %v621 = vpop.xlane.xlu0 %620
        %v622 = vsub.f32 %v589, %v600
        %v623 = vsub.f32 %v590, %v603
        %v624 = vsub.f32 %v591, %v606
        %v625 = vsub.f32 %v592, %v609
        %v626 = vsub.f32 %v593, %v612
        %v627 = vsub.f32 %v594, %v615
        %v628 = vsub.f32 %v595, %v618
        %v629 = vsub.f32 %v596, %v621
        %v630 = vmul.f32 %v622, 1.442695
        %v631 = vpow.pop %v630
        %v632 = vmul.f32 %v623, 1.442695
        %v633 = vpow.pop %v632
        %v634 = vmul.f32 %v624, 1.442695
        %v635 = vpow.pop %v634
        %v636 = vmul.f32 %v625, 1.442695
        %v637 = vpow.pop %v636
        %v638 = vmul.f32 %v626, 1.442695
        %v639 = vpow.pop %v638
        %v640 = vmul.f32 %v627, 1.442695
        %v641 = vpow.pop %v640
        %v642 = vmul.f32 %v628, 1.442695
        %v643 = vpow.pop %v642
        %v644 = vmul.f32 %v629, 1.442695
        %v645 = vpow.pop %v644
        %v646 = vsel %vm597, %v631, 0.0
        %647 = vadd.xlane.f32.xlu0 %v646
        %v648 = vpop.xlane.xlu0 %647
        %v649 = vsel %vm597, %v633, 0.0
        %650 = vadd.xlane.f32.xlu0 %v649
        %v651 = vpop.xlane.xlu0 %650
        %v652 = vsel %vm597, %v635, 0.0
        %653 = vadd.xlane.f32.xlu0 %v652
        %v654 = vpop.xlane.xlu0 %653
        %v655 = vsel %vm597, %v637, 0.0
        %656 = vadd.xlane.f32.xlu0 %v655
        %v657 = vpop.xlane.xlu0 %656
        %v658 = vsel %vm597, %v639, 0.0
        %659 = vadd.xlane.f32.xlu0 %v658
        %v660 = vpop.xlane.xlu0 %659
        %v661 = vsel %vm597, %v641, 0.0
        %662 = vadd.xlane.f32.xlu0 %v661
        %v663 = vpop.xlane.xlu0 %662
        %v664 = vsel %vm597, %v643, 0.0
        %665 = vadd.xlane.f32.xlu0 %v664
        %v666 = vpop.xlane.xlu0 %665
        %v667 = vsel %vm597, %v645, 0.0
        %668 = vadd.xlane.f32.xlu0 %v667
        %v669 = vpop.xlane.xlu0 %668
        %v670 = vrcp.pop %v648
        %v671 = vrcp.pop %v651
        %v672 = vrcp.pop %v654
        %v673 = vrcp.pop %v657
        %v674 = vrcp.pop %v660
        %v675 = vrcp.pop %v663
        %v676 = vrcp.pop %v666
        %v677 = vrcp.pop %v669
        %v678 = vmul.f32 %v631, %v670
        %v679 = vmul.f32 %v633, %v671
        %v680 = vmul.f32 %v635, %v672
        %v681 = vmul.f32 %v637, %v673
        %v682 = vmul.f32 %v639, %v674
        %v683 = vmul.f32 %v641, %v675
        %v684 = vmul.f32 %v643, %v676
        %v685 = vmul.f32 %v645, %v677
        %v686 = vpack.c.bf16 %v679, %v678
        %v687 = vpack.c.bf16 %v681, %v680
        %v688 = vpack.c.bf16 %v683, %v682
        %v689 = vpack.c.bf16 %v685, %v684
        %v690 = vpack.c.bf16 %v466, %v464
        %v691 = vpack.c.bf16 %v471, %v469
        %v692 = vpack.c.bf16 %v476, %v474
        %v693 = vpack.c.bf16 %v481, %v479
        %698 = vrot.lane.b32.xlu0 %v690, 96
        %v699 = vpop.permute.xlu0 %698
        %700 = vrot.lane.b32.xlu0 %v691, 96
        %v701 = vpop.permute.xlu0 %700
        %702 = vrot.lane.b32.xlu0 %v692, 96
        %v703 = vpop.permute.xlu0 %702
        %704 = vrot.lane.b32.xlu0 %v693, 96
        %v705 = vpop.permute.xlu0 %704
        %v711 = vsel %vm597, %v686, 0
        %v714 = vsel %vm597, %v687, 0
        %v717 = vsel %vm597, %v688, 0
        %v720 = vsel %vm597, %v689, 0
        %722 = vmatpush.bf16.msra.mxu0 0
        %723 = vmatpush.bf16.msra.mxu0 0
        %724 = vmatpush.bf16.msra.mxu0 0
        %725 = vmatpush.bf16.msra.mxu0 0
        %726 = vmatpush.bf16.msra.mxu0 %v705
        %727 = vmatpush.bf16.msra.mxu0 %v703
        %728 = vmatpush.bf16.msra.mxu0 %v701
        %729 = vmatpush.bf16.msra.mxu0 %v699
        %730 = vmatmul.bf16.gmra.mxu0 %v711
        %v731 = vpop.f32.mrf.mxu0
        %v732 = vadd.f32 0.0, %v731
        %v733 = vpop.f32.mrf.mxu0
        %v734 = vadd.f32 0.0, %v733
        %735 = vmatmul.bf16.gmra.mxu0 %v714
        %v736 = vpop.f32.mrf.mxu0
        %v737 = vadd.f32 0.0, %v736
        %v738 = vpop.f32.mrf.mxu0
        %v739 = vadd.f32 0.0, %v738
        %740 = vmatmul.bf16.gmra.mxu0 %v717
        %v741 = vpop.f32.mrf.mxu0
        %v742 = vadd.f32 0.0, %v741
        %v743 = vpop.f32.mrf.mxu0
        %v744 = vadd.f32 0.0, %v743
        %745 = vmatmul.bf16.gmra.mxu0 %v720
        %v746 = vpop.f32.mrf.mxu0
        %v747 = vadd.f32 0.0, %v746
        %v748 = vpop.f32.mrf.mxu0
        %v749 = vadd.f32 0.0, %v748
        %750 = vdwg.mxu0
        %v751 = vpack.c.bf16 %v734, %v732
        %v752 = vpack.c.bf16 %v739, %v737
        %v753 = vpack.c.bf16 %v744, %v742
        %v754 = vpack.c.bf16 %v749, %v747
        %v755 = vld [vmem:[%s4] sm:$0xf]
        %v756 = vld [vmem:[%s4 + $0x4] sm:$0xf]
        %v759 = vunpack.c.l.b16 %v755
        %v760 = vunpack.c.l.b16 %v756
        %v761 = vpack.c.b16 %v760, %v759
        %v764 = vsel %vm507, %v751, 0
        %v767 = vsel %vm507, %v752, 0
        %v770 = vsel %vm507, %v753, 0
        %v773 = vsel %vm507, %v754, 0
        %775 = vmatpush.bf16.msra.mxu0 0
        %776 = vmatpush.bf16.msra.mxu0 0
        %777 = vmatpush.bf16.msra.mxu0 0
        %778 = vmatpush.bf16.msra.mxu0 0
        %779 = vmatpush.bf16.msra.mxu0 0
        %780 = vmatpush.bf16.msra.mxu0 0
        %781 = vmatpush.bf16.msra.mxu0 0
        %782 = vmatpush.bf16.msra.mxu0 %v761
        %783 = vmatmul.bf16.gmra.mxu0 %v764
        %v784 = vpop.f32.mrf.mxu0
        %v785 = vadd.f32 0.0, %v784
        %v786 = vpop.f32.mrf.mxu0
        %v787 = vadd.f32 0.0, %v786
        %788 = vmatmul.bf16.gmra.mxu0 %v767
        %v789 = vpop.f32.mrf.mxu0
        %v790 = vadd.f32 0.0, %v789
        %v791 = vpop.f32.mrf.mxu0
        %v792 = vadd.f32 0.0, %v791
        %793 = vmatmul.bf16.gmra.mxu0 %v770
        %v794 = vpop.f32.mrf.mxu0
        %v795 = vadd.f32 0.0, %v794
        %v796 = vpop.f32.mrf.mxu0
        %v797 = vadd.f32 0.0, %v796
        %798 = vmatmul.bf16.gmra.mxu0 %v773
        %v799 = vpop.f32.mrf.mxu0
        %v800 = vadd.f32 0.0, %v799
        %v801 = vpop.f32.mrf.mxu0
        %v802 = vadd.f32 0.0, %v801
        %803 = vdwg.mxu0
        %v804 = vadd.f32 %v357, %v785
        %v805 = vadd.f32 %v358, %v787
        %v806 = vadd.f32 %v359, %v790
        %v807 = vadd.f32 %v360, %v792
        %v808 = vadd.f32 %v361, %v795
        %v809 = vadd.f32 %v362, %v797
        %v810 = vadd.f32 %v363, %v800
        %v811 = vadd.f32 %v364, %v802
        %v812 = vld [vmem:[%s6] sm:$0x1]
        %v813 = vld [vmem:[%s8] sm:$0x1]
        %v814 = vpack.c.bf16 %v805, %v804
        %v815 = vpack.c.bf16 %v807, %v806
        %v816 = vpack.c.bf16 %v809, %v808
        %v817 = vpack.c.bf16 %v811, %v810
        %v818 = vld [vmem:[%s5] sm:$0xf]
        %v819 = vld [vmem:[%s5 + $0x4] sm:$0xf]
        %v820 = vld [vmem:[%s5 + $0x8] sm:$0xf]
        %v821 = vld [vmem:[%s5 + $0xc] sm:$0xf]
        %v823 = vperm.slane %v812, 0
        %v829 = vunpack.c.l.b16 %v818
        %v830 = vunpack.c.l.b16 %v819
        %v831 = vunpack.c.l.b16 %v820
        %v832 = vunpack.c.l.b16 %v821
        %v833 = vpack.c.b16 %v830, %v829
        %v834 = vpack.c.b16 %v832, %v831
        %vm837 = vcmask 261120
        %v839 = vsel %vm837, %v814, 0
        %v842 = vsel %vm837, %v815, 0
        %v845 = vsel %vm837, %v816, 0
        %v848 = vsel %vm837, %v817, 0
        %850 = vmatpush.bf16.msra.mxu0 0
        %851 = vmatpush.bf16.msra.mxu0 0
        %852 = vmatpush.bf16.msra.mxu0 0
        %853 = vmatpush.bf16.msra.mxu0 0
        %854 = vmatpush.bf16.msra.mxu0 0
        %855 = vmatpush.bf16.msra.mxu0 0
        %856 = vmatpush.bf16.msra.mxu0 %v834
        %857 = vmatpush.bf16.msra.mxu0 %v833
        %858 = vmatmul.bf16.gmra.mxu0 %v839
        %v859 = vpop.f32.mrf.mxu0
        %v860 = vadd.f32 %v823, %v859
        %v861 = vpop.f32.mrf.mxu0
        %v862 = vadd.f32 %v823, %v861
        %863 = vmatmul.bf16.gmra.mxu0 %v842
        %v864 = vpop.f32.mrf.mxu0
        %v865 = vadd.f32 %v823, %v864
        %v866 = vpop.f32.mrf.mxu0
        %v867 = vadd.f32 %v823, %v866
        %868 = vmatmul.bf16.gmra.mxu0 %v845
        %v869 = vpop.f32.mrf.mxu0
        %v870 = vadd.f32 %v823, %v869
        %v871 = vpop.f32.mrf.mxu0
        %v872 = vadd.f32 %v823, %v871
        %873 = vmatmul.bf16.gmra.mxu0 %v848
        %v874 = vpop.f32.mrf.mxu0
        %v875 = vadd.f32 %v823, %v874
        %v876 = vpop.f32.mrf.mxu0
        %v877 = vadd.f32 %v823, %v876
        %878 = vdwg.mxu0
        %v879 = vmax.f32 %v860, 0.0
        %v880 = vmax.f32 %v862, 0.0
        %v881 = vmax.f32 %v865, 0.0
        %v882 = vmax.f32 %v867, 0.0
        %v883 = vmax.f32 %v870, 0.0
        %v884 = vmax.f32 %v872, 0.0
        %v885 = vmax.f32 %v875, 0.0
        %v886 = vmax.f32 %v877, 0.0
        %v887 = vpack.c.bf16 %v880, %v879
        %v888 = vpack.c.bf16 %v882, %v881
        %v889 = vpack.c.bf16 %v884, %v883
        %v890 = vpack.c.bf16 %v886, %v885
        %v891 = vld [vmem:[%s7] sm:$0xf]
        %v892 = vld [vmem:[%s7 + $0x4] sm:$0xf]
        %v893 = vld [vmem:[%s7 + $0x8] sm:$0xf]
        %v894 = vld [vmem:[%s7 + $0xc] sm:$0xf]
        %v896 = vperm.slane %v813, 0
        %v902 = vunpack.c.l.b16 %v891
        %v903 = vunpack.c.l.b16 %v892
        %v904 = vunpack.c.l.b16 %v893
        %v905 = vunpack.c.l.b16 %v894
        %v906 = vpack.c.b16 %v903, %v902
        %v907 = vpack.c.b16 %v905, %v904
        %v911 = vsel %vm837, %v887, 0
        %v914 = vsel %vm837, %v888, 0
        %v917 = vsel %vm837, %v889, 0
        %v920 = vsel %vm837, %v890, 0
        %922 = vmatpush.bf16.msra.mxu0 0
        %923 = vmatpush.bf16.msra.mxu0 0
        %924 = vmatpush.bf16.msra.mxu0 0
        %925 = vmatpush.bf16.msra.mxu0 0
        %926 = vmatpush.bf16.msra.mxu0 0
        %927 = vmatpush.bf16.msra.mxu0 0
        %928 = vmatpush.bf16.msra.mxu0 %v907
        %929 = vmatpush.bf16.msra.mxu0 %v906
        %930 = vmatmul.bf16.gmra.mxu0 %v911
        %v931 = vpop.f32.mrf.mxu0
        %v932 = vadd.f32 %v896, %v931
        %v933 = vpop.f32.mrf.mxu0
        %v934 = vadd.f32 %v896, %v933
        %935 = vmatmul.bf16.gmra.mxu0 %v914
        %v936 = vpop.f32.mrf.mxu0
        %v937 = vadd.f32 %v896, %v936
        %v938 = vpop.f32.mrf.mxu0
        %v939 = vadd.f32 %v896, %v938
        %940 = vmatmul.bf16.gmra.mxu0 %v917
        %v941 = vpop.f32.mrf.mxu0
        %v942 = vadd.f32 %v896, %v941
        %v943 = vpop.f32.mrf.mxu0
        %v944 = vadd.f32 %v896, %v943
        %945 = vmatmul.bf16.gmra.mxu0 %v920
        %v946 = vpop.f32.mrf.mxu0
        %v947 = vadd.f32 %v896, %v946
        %v948 = vpop.f32.mrf.mxu0
        %v949 = vadd.f32 %v896, %v948
        %950 = vdwg.mxu0
        %v951 = vadd.f32 %v804, %v932
        %v952 = vadd.f32 %v805, %v934
        %v953 = vadd.f32 %v806, %v937
        %v954 = vadd.f32 %v807, %v939
        %v955 = vadd.f32 %v808, %v942
        %v956 = vadd.f32 %v809, %v944
        %v957 = vadd.f32 %v810, %v947
        %v958 = vadd.f32 %v811, %v949
        %959 = vst.msk [vmem:[%s342] sm:$0xff] %vm837, %v951
        %960 = vst.msk [vmem:[%s342 + $0x8] sm:$0xff] %vm837, %v952
        %961 = vst.msk [vmem:[%s342 + $0x10] sm:$0xff] %vm837, %v953
        %962 = vst.msk [vmem:[%s342 + $0x18] sm:$0xff] %vm837, %v954
        %963 = vst.msk [vmem:[%s342 + $0x20] sm:$0xff] %vm837, %v955
        %964 = vst.msk [vmem:[%s342 + $0x28] sm:$0xff] %vm837, %v956
        %965 = vst.msk [vmem:[%s342 + $0x30] sm:$0xff] %vm837, %v957
        %966 = vst.msk [vmem:[%s342 + $0x38] sm:$0xff] %vm837, %v958
        %s967 = sand.u32 %s230, 1
        %s968 = scalar_lea.sflag [#allocation3], %s967
        %s969 = sand.u32 %s230, 1
        %s970 = smul.addr %s969, 64
        %s971 = scalar_lea.vmem [#allocation2], %s970
        // Predicated region
        $region57: #{attention_forward.1} parent=55 // pred_check
          %p972 = pneg %p240
        $region58: #{attention_forward.1} parent=55 // pred_check_branch
          %974 = sbr.rel (%p972) target = $region60
        $region59: #{attention_forward.1} parent=55 // pred_region
          %s975 = smul.u32 8, %s23
          %977 = vsyncadd %s968, 0
          %s978 = smul.addr %s975, 8
          %s979 = scalar_lea.hbm %s9, %s978
          %s980 = sshll.u32 %s971, 4
          %s981 = int_to_ptr.vmem [resolvable:$true] %s980
          %s982 = sshll.u32 %s979, 4
          %s983 = int_to_ptr.hbm [resolvable:$true] %s982
          %988 = dma.vmem_to_hbm [thread:$0]  %s981, 1024, %s983, %s968, 128, 128, 8
        $region60: #{attention_forward.1} parent=55 // pred_fallthru
          _
      $region56: #{attention_forward.1} parent=5 // pred_fallthru
        _
      %p989 = scmp.le.s32.totalorder 2, %s18
      // Predicated region
      $region61: #{attention_forward.1} parent=5 // pred_check
        %p990 = pneg %p989
      $region62: #{attention_forward.1} parent=5 // pred_check_branch
        %992 = sbr.rel (%p990) target = $region64
      $region63: #{attention_forward.1} parent=5 // pred_region
        %s993 = ssub.s32 %s18, 2
        // Predicated region
        $region65: #{attention_forward.1} parent=63 // pred_check
          %p994 = pneg %p246
        $region66: #{attention_forward.1} parent=63 // pred_check_branch
          %996 = sbr.rel (%p994) target = $region68
        $region67: #{attention_forward.1} parent=63 // pred_region
          %s997 = sand.u32 %s231, 1
          %s998 = scalar_lea.sflag [#allocation3], %s997
          %s999 = sand.u32 %s231, 1
          %s1000 = smul.addr %s999, 64
          %s1001 = scalar_lea.vmem [#allocation2], %s1000
          %1003 = dma.done %s998, 1024
        $region68: #{attention_forward.1} parent=63 // pred_fallthru
          _
      $region64: #{attention_forward.1} parent=5 // pred_fallthru
        _
    $region6: #{attention_forward.1} parent=1 // loop_footer
      %s22 = sadd.s32 1, %s18
    $region7: #{attention_forward.1} parent=1 // loop_footer_branch
      %17 = sbr.rel target = $region3
    $region8: #{attention_forward.1} parent=1 // loop_exit
      _
    %1004 = vsyncpa [#allocation3], 1
    %s1005 = scalar_lea.sflag [#allocation3], 1
    %1006 = vsyncpa %s1005, 1

</llo_original>
